<compile_context>
chip_gen: v5e
topology: v5e:2x2
jax: 0.10.0
libtpu: 0.0.40
codegen_flags: <defaults>
</compile_context>

<pallas_src>
import functools

import jax
import jax.numpy as jnp
from jax.experimental import pallas as pl
from jax.experimental.pallas import tpu as pltpu


# ----------------------------------------------------------------------------
# Capacity / sizing helpers
# ----------------------------------------------------------------------------

def _vmem_capacity_bytes():
    """Physical VMEM per TensorCore (v5e/v6e: 128 MiB, v7x: 64 MiB)."""
    try:
        return int(pltpu.get_tpu_info().vmem_capacity_bytes)
    except Exception:
        return 64 << 20  # conservative default (v7x per-TC size)


def _vmem_limit_bytes(block_bytes, weight_bytes, capacity):
    # 2x double-buffered input + 2x output blocks + <=1 block of intermediates.
    want = 5 * block_bytes + weight_bytes + (2 << 20)
    return int(min(max(want, 8 << 20), capacity - (4 << 20)))


def _cost_estimate(B, HW, C, Ch, itemsize):
    # Pure-bandwidth pass: 1R + 1W of x plus the tiny SE MLP.
    flops = 2 * B * C * Ch * 2 + 2 * B * HW * C
    transcendentals = B * C  # sigmoid
    bytes_accessed = 2 * B * HW * C * itemsize + 4 * (2 * C * Ch + C + Ch)
    return pl.CostEstimate(flops=int(flops), transcendentals=int(transcendentals),
                           bytes_accessed=int(bytes_accessed))


def _select_bb(B, img_bytes, weight_bytes, budget):
    """Images per grid step for the single-pass kernel (None -> use two-pass)."""
    per_img = 5 * img_bytes
    fixed = weight_bytes + (2 << 20)
    if fixed + per_img > budget:
        return None
    bb = int(min(B, max(1, (budget - fixed) // per_img)))
    if B >= 2:
        # Keep >=2 grid steps so both v7x TensorCores get work.
        bb = min(bb, -(-B // 2))
    while B % bb != 0:  # blocks must tile the batch exactly
        bb -= 1
    # TODO(synk): for B == 1 on v7x, a second "parallel" grid axis over HW
    # (two-pass style) would keep the second TensorCore busy.
    return bb


def _pick_hw_tile(HW, quantum, max_tile):
    """Largest divisor of HW that is a multiple of `quantum` and <= max_tile."""
    if HW <= max_tile:
        return HW
    best = None
    d = 1
    while d * d <= HW:
        if HW % d == 0:
            for cand in (d, HW // d):
                if cand <= max_tile and cand % quantum == 0 and (best is None or cand > best):
                    best = cand
        d += 1
    # TODO(synk): if no aligned divisor exists, fall back to a full-HW block
    # (correct, may exceed the VMEM budget and spill).
    return best if best is not None else HW


# ----------------------------------------------------------------------------
# Single-pass kernels (whole image(s) per grid step, 1R + 1W)
# ----------------------------------------------------------------------------

def _srm_kernel_nhwc(x_ref, w1_ref, b1_ref, w2_ref, b2_ref, o_ref, *, inv_hw):
    # x_ref/o_ref: (BB, HW, C) channels-last, lane-dense block.
    pooled = jnp.sum(x_ref[...], axis=1, dtype=jnp.float32) * inv_hw        # (BB, C)
    h = jnp.maximum(
        jnp.dot(pooled, w1_ref[...], preferred_element_type=jnp.float32) + b1_ref[...], 0.0)
    s = jax.nn.sigmoid(
        jnp.dot(h, w2_ref[...], preferred_element_type=jnp.float32) + b2_ref[...])  # (BB, C)
    x = x_ref[...]
    # Rescale in the I/O dtype (bf16 rescale on v6e/v7x halves VALU/store work).
    # TODO(synk): on v5e with bf16 I/O, an f32 multiply avoids extra converts.
    o_ref[...] = (x * s[:, None, :].astype(x.dtype)).astype(o_ref.dtype)


def _srm_kernel_nchw(x_ref, w1_ref, b1_ref, w2_ref, b2_ref, o_ref, *, inv_hw):
    # x_ref/o_ref: (BB, C, HW) NCHW-native block; mean = XLU lane reduce.
    pooled = jnp.sum(x_ref[...], axis=2, dtype=jnp.float32) * inv_hw        # (BB, C)
    h = jnp.maximum(
        jnp.dot(pooled, w1_ref[...], preferred_element_type=jnp.float32) + b1_ref[...], 0.0)
    s = jax.nn.sigmoid(
        jnp.dot(h, w2_ref[...], preferred_element_type=jnp.float32) + b2_ref[...])  # (BB, C)
    x = x_ref[...]
    o_ref[...] = (x * s[:, :, None].astype(x.dtype)).astype(o_ref.dtype)


# ----------------------------------------------------------------------------
# Two-pass fallback kernels (HW tiled; for images too large for one block)
# ----------------------------------------------------------------------------

def _srm_pool_kernel_nhwc(x_ref, pooled_ref, acc_ref, *, inv_hw):
    t = pl.program_id(1)

    @pl.when(t == 0)
    def _init():
        acc_ref[...] = jnp.zeros_like(acc_ref)

    acc_ref[...] += jnp.sum(x_ref[...], axis=1, keepdims=True, dtype=jnp.float32)

    @pl.when(t == pl.num_programs(1) - 1)
    def _fin():
        pooled_ref[...] = acc_ref[...] * inv_hw


def _srm_pool_kernel_nchw(x_ref, pooled_ref, acc_ref, *, inv_hw):
    t = pl.program_id(1)

    @pl.when(t == 0)
    def _init():
        acc_ref[...] = jnp.zeros_like(acc_ref)

    acc_ref[...] += jnp.sum(x_ref[...], axis=2, keepdims=True, dtype=jnp.float32)

    @pl.when(t == pl.num_programs(1) - 1)
    def _fin():
        pooled_ref[...] = acc_ref[...] * inv_hw


def _srm_scale_kernel(s_ref, x_ref, o_ref):
    x = x_ref[...]
    o_ref[...] = (x * s_ref[...].astype(x.dtype)).astype(o_ref.dtype)


# ----------------------------------------------------------------------------
# pallas_call wrappers
# ----------------------------------------------------------------------------

def _srm_single_pass(x3, w1, b1, w2, b2, *, channels_last, bb, capacity):
    if channels_last:
        B, HW, C = x3.shape
        kernel = functools.partial(_srm_kernel_nhwc, inv_hw=1.0 / HW)
        x_spec = pl.BlockSpec((bb, HW, C), lambda i: (i, 0, 0))
    else:
        B, C, HW = x3.shape
        kernel = functools.partial(_srm_kernel_nchw, inv_hw=1.0 / HW)
        x_spec = pl.BlockSpec((bb, C, HW), lambda i: (i, 0, 0))
    Ch = w1.shape[1]
    itemsize = jnp.dtype(x3.dtype).itemsize
    weight_bytes = 4 * (w1.size + b1.size + w2.size + b2.size)
    vmem_limit = _vmem_limit_bytes(bb * HW * C * itemsize, weight_bytes, capacity)

    return pl.pallas_call(
        kernel,
        out_shape=jax.ShapeDtypeStruct(x3.shape, x3.dtype),
        grid=(B // bb,),
        in_specs=[
            x_spec,
            # Weights: constant block index across the grid -> fetched once, resident.
            pl.BlockSpec((C, Ch), lambda i: (0, 0)),
            pl.BlockSpec((1, Ch), lambda i: (0, 0)),
            pl.BlockSpec((Ch, C), lambda i: (0, 0)),
            pl.BlockSpec((1, C), lambda i: (0, 0)),
        ],
        out_specs=x_spec,
        compiler_params=pltpu.CompilerParams(
            dimension_semantics=("parallel",),
            vmem_limit_bytes=vmem_limit),
        cost_estimate=_cost_estimate(B, HW, C, Ch, itemsize),
    )(x3, w1, b1, w2, b2)


def _srm_two_pass(x3, w1, b1, w2, b2, *, channels_last, hw_tile, capacity):
    if channels_last:
        B, HW, C = x3.shape
        pool_kernel = functools.partial(_srm_pool_kernel_nhwc, inv_hw=1.0 / HW)
        x_spec = pl.BlockSpec((1, hw_tile, C), lambda b, t: (b, t, 0))
        small_shape = (B, 1, C)
        small_spec = pl.BlockSpec((1, 1, C), lambda b, t: (b, 0, 0))
    else:
        B, C, HW = x3.shape
        pool_kernel = functools.partial(_srm_pool_kernel_nchw, inv_hw=1.0 / HW)
        x_spec = pl.BlockSpec((1, C, hw_tile), lambda b, t: (b, 0, t))
        small_shape = (B, C, 1)
        small_spec = pl.BlockSpec((1, C, 1), lambda b, t: (b, 0, 0))
    itemsize = jnp.dtype(x3.dtype).itemsize
    n_t = HW // hw_tile
    vmem_limit = _vmem_limit_bytes(hw_tile * C * itemsize, 0, capacity)

    # Pass 1: per-image channel sums (x read once).
    pooled = pl.pallas_call(
        pool_kernel,
        out_shape=jax.ShapeDtypeStruct(small_shape, jnp.float32),
        grid=(B, n_t),
        in_specs=[x_spec],
        out_specs=small_spec,
        scratch_shapes=[pltpu.VMEM(small_shape[1:] if False else (1,) + small_shape[1:],
                                   jnp.float32)],
        compiler_params=pltpu.CompilerParams(
            dimension_semantics=("parallel", "arbitrary"),
            vmem_limit_bytes=vmem_limit),
        cost_estimate=pl.CostEstimate(
            flops=int(B * HW * C), transcendentals=0,
            bytes_accessed=int(B * HW * C * itemsize + B * C * 4)),
    )(x3)

    # Tiny SE MLP on (B, C): not worth a kernel.
    p2 = pooled.reshape(B, C)
    h = jnp.maximum(p2 @ w1 + b1, 0.0)
    s = jax.nn.sigmoid(h @ w2 + b2).astype(jnp.float32).reshape(small_shape)

    # Pass 2: channel-wise rescale (x read once more + written once).
    return pl.pallas_call(
        _srm_scale_kernel,
        out_shape=jax.ShapeDtypeStruct(x3.shape, x3.dtype),
        grid=(B, n_t),
        in_specs=[small_spec, x_spec],
        out_specs=x_spec,
        compiler_params=pltpu.CompilerParams(
            dimension_semantics=("parallel", "parallel"),
            vmem_limit_bytes=vmem_limit),
        cost_estimate=pl.CostEstimate(
            flops=int(B * HW * C), transcendentals=0,
            bytes_accessed=int(2 * B * HW * C * itemsize + B * C * 4)),
    )(s, x3)


def _srm_forward(x3, w1, b1, w2, b2, *, channels_last, force_two_pass, hw_tile_override):
    if channels_last:
        B, HW, C = x3.shape
    else:
        B, C, HW = x3.shape
    itemsize = jnp.dtype(x3.dtype).itemsize
    img_bytes = HW * C * itemsize
    weight_bytes = 4 * (w1.size + b1.size + w2.size + b2.size)
    capacity = _vmem_capacity_bytes()
    budget = capacity - (8 << 20)

    bb = None if force_two_pass else _select_bb(B, img_bytes, weight_bytes, budget)
    if bb is not None:
        return _srm_single_pass(x3, w1, b1, w2, b2,
                                channels_last=channels_last, bb=bb, capacity=capacity)

    # Large-image fallback: two roofline-bound passes with HW tiled.
    if hw_tile_override is not None:
        assert HW % hw_tile_override == 0, "hw_tile_override must divide H*W"
        hw_tile = int(hw_tile_override)
    else:
        quantum = 8 if channels_last else 128
        max_tile = int(max(quantum, (budget - (2 << 20)) // (5 * C * itemsize)))
        hw_tile = _pick_hw_tile(HW, quantum, max_tile)
    return _srm_two_pass(x3, w1, b1, w2, b2,
                         channels_last=channels_last, hw_tile=hw_tile, capacity=capacity)


def srm_forward_nhwc(x_nhwc, w1, b1, w2, b2, *, force_two_pass=False, hw_tile_override=None):
    """Channels-last fast path. x_nhwc: (B, H, W, C) f32 or bf16."""
    B, H, W, C = x_nhwc.shape
    out = _srm_forward(x_nhwc.reshape(B, H * W, C), w1, b1, w2, b2,
                       channels_last=True, force_two_pass=force_two_pass,
                       hw_tile_override=hw_tile_override)
    return out.reshape(B, H, W, C)


def srm_forward_nchw(x_nchw, w1, b1, w2, b2, *, force_two_pass=False, hw_tile_override=None):
    """NCHW-native path (matches the PyTorch layout) — reshape only, no transposes."""
    B, C, H, W = x_nchw.shape
    out = _srm_forward(x_nchw.reshape(B, C, H * W), w1, b1, w2, b2,
                       channels_last=False, force_two_pass=force_two_pass,
                       hw_tile_override=hw_tile_override)
    return out.reshape(B, C, H, W)


# ----------------------------------------------------------------------------
# Params / reference
# ----------------------------------------------------------------------------

def init_params(key, in_channels):
    """Deterministic init matching nn.Linear shapes (stored pre-transposed)."""
    hidden = in_channels // 16
    k1, k2, k3, k4 = jax.random.split(key, 4)
    lim1 = 1.0 / jnp.sqrt(in_channels)
    lim2 = 1.0 / jnp.sqrt(hidden)
    # PyTorch Linear weight is (out, in); we store the transpose for y @ W.
    w1 = jax.random.uniform(k1, (in_channels, hidden), jnp.float32, -lim1, lim1)
    b1 = jax.random.uniform(k2, (1, hidden), jnp.float32, -lim1, lim1)
    w2 = jax.random.uniform(k3, (hidden, in_channels), jnp.float32, -lim2, lim2)
    b2 = jax.random.uniform(k4, (1, in_channels), jnp.float32, -lim2, lim2)
    return w1, b1, w2, b2


def srm_reference_nchw(x, w1, b1, w2, b2):
    """Pure-JAX reference of the PyTorch forward (NCHW)."""
    pooled = jnp.mean(x, axis=(2, 3))                 # (B, C)
    h = jnp.maximum(pooled @ w1 + b1, 0.0)            # (B, Ch)
    s = jax.nn.sigmoid(h @ w2 + b2)                   # (B, C)
    return x * s[:, :, None, None]


if __name__ == "__main__":
    key = jax.random.PRNGKey(0)
    kx, kp = jax.random.split(key)

    # in_channels must be >= 16 (hidden = C // 16); C=128 keeps the lane axis dense.
    B, C, H, W = 4, 128, 8, 8          # hidden = 8, HW = 64
    x_nchw = jax.random.normal(kx, (B, C, H, W), jnp.float32)
    w1, b1, w2, b2 = init_params(kp, C)
    ref = srm_reference_nchw(x_nchw, w1, b1, w2, b2)

    # 1) NCHW-native single-pass (f32): exact semantics, no boundary transposes.
    out = jax.block_until_ready(srm_forward_nchw(x_nchw, w1, b1, w2, b2))
    assert out.shape == (B, C, H, W)
    assert jnp.allclose(out, ref, atol=1e-5, rtol=1e-5), "NCHW f32 mismatch"

    # 2) NHWC-native single-pass with bf16 I/O (halved HBM traffic).
    x_nhwc_bf16 = jnp.transpose(x_nchw, (0, 2, 3, 1)).astype(jnp.bfloat16)
    out_bf16 = jax.block_until_ready(srm_forward_nhwc(x_nhwc_bf16, w1, b1, w2, b2))
    out_bf16_nchw = jnp.transpose(out_bf16.astype(jnp.float32), (0, 3, 1, 2))
    assert jnp.allclose(out_bf16_nchw, ref, atol=1e-1, rtol=5e-2), "NHWC bf16 mismatch"

    # 3) Forced two-pass fallback (large-image path), NHWC f32, HW tiled by 16.
    x_nhwc = jnp.transpose(x_nchw, (0, 2, 3, 1))
    out_tp = jax.block_until_ready(
        srm_forward_nhwc(x_nhwc, w1, b1, w2, b2, force_two_pass=True, hw_tile_override=16))
    out_tp_nchw = jnp.transpose(out_tp, (0, 3, 1, 2))
    assert jnp.allclose(out_tp_nchw, ref, atol=1e-5, rtol=1e-5), "NHWC two-pass mismatch"

    # 4) Forced two-pass fallback, NCHW f32 (tile falls back to full HW=64 < 128 lanes).
    out_tp2 = jax.block_until_ready(
        srm_forward_nchw(x_nchw, w1, b1, w2, b2, force_two_pass=True))
    assert jnp.allclose(out_tp2, ref, atol=1e-5, rtol=1e-5), "NCHW two-pass mismatch"

    print("KERNEL_OK")
</pallas_src>

<mosaic_0001>
module attributes {stable_mosaic.version = 11 : i64} {
  func.func @_srm_kernel_nchw(%arg0: i32, %arg1: memref<2x128x64xf32, #tpu.memory_space<vmem>>, %arg2: memref<128x8xf32, #tpu.memory_space<vmem>>, %arg3: memref<1x8xf32, #tpu.memory_space<vmem>>, %arg4: memref<8x128xf32, #tpu.memory_space<vmem>>, %arg5: memref<1x128xf32, #tpu.memory_space<vmem>>, %arg6: memref<2x128x64xf32, #tpu.memory_space<vmem>>) attributes {dimension_semantics = [#tpu.dimension_semantics<parallel>], iteration_bounds = array<i64: 2>, scalar_prefetch = 0 : i64, scratch_operands = 0 : i64, tpu.core_type = #tpu.core_type<tc>, window_params = [{transform_indices = @transform_0, window_bounds = array<i64: 2, 128, 64>}, {pipeline_mode = #tpu.pipeline_mode<synchronous>, transform_indices = @transform_1, window_bounds = array<i64: 128, 8>}, {pipeline_mode = #tpu.pipeline_mode<synchronous>, transform_indices = @transform_2, window_bounds = array<i64: 1, 8>}, {pipeline_mode = #tpu.pipeline_mode<synchronous>, transform_indices = @transform_3, window_bounds = array<i64: 8, 128>}, {pipeline_mode = #tpu.pipeline_mode<synchronous>, transform_indices = @transform_4, window_bounds = array<i64: 1, 128>}, {transform_indices = @transform_5, window_bounds = array<i64: 2, 128, 64>}]} {
    %c0 = arith.constant 0 : index
    %c0_0 = arith.constant 0 : index
    %c0_1 = arith.constant 0 : index
    %0 = vector.load %arg1[%c0, %c0_0, %c0_1] : memref<2x128x64xf32, #tpu.memory_space<vmem>>, vector<2x128x64xf32>
    %cst = arith.constant dense<0.000000e+00> : vector<2x128xf32>
    %1 = vector.multi_reduction <add>, %0, %cst [2] : vector<2x128x64xf32> to vector<2x128xf32>
    %cst_2 = arith.constant 1.562500e-02 : f32
    %2 = vector.broadcast %cst_2 : f32 to vector<2x128xf32>
    %3 = arith.mulf %1, %2 : vector<2x128xf32>
    %c0_3 = arith.constant 0 : index
    %c0_4 = arith.constant 0 : index
    %4 = vector.load %arg2[%c0_3, %c0_4] : memref<128x8xf32, #tpu.memory_space<vmem>>, vector<128x8xf32>
    %cst_5 = arith.constant dense<0.000000e+00> : vector<2x8xf32>
    %5 = tpu.matmul %3, %4, %cst_5 {dimension_numbers = #tpu.dot_dimension_numbers<[1], [0], [0], [1], [0, 0, 1, 1], [], []>} : vector<2x128xf32>, vector<128x8xf32>, vector<2x8xf32> -> vector<2x8xf32>
    %c0_6 = arith.constant 0 : index
    %c0_7 = arith.constant 0 : index
    %6 = vector.load %arg3[%c0_6, %c0_7] : memref<1x8xf32, #tpu.memory_space<vmem>>, vector<1x8xf32>
    %7 = vector.broadcast %6 : vector<1x8xf32> to vector<2x8xf32>
    %8 = arith.addf %5, %7 : vector<2x8xf32>
    %cst_8 = arith.constant 0.000000e+00 : f32
    %9 = vector.broadcast %cst_8 : f32 to vector<2x8xf32>
    %10 = arith.maximumf %8, %9 : vector<2x8xf32>
    %c0_9 = arith.constant 0 : index
    %c0_10 = arith.constant 0 : index
    %11 = vector.load %arg4[%c0_9, %c0_10] : memref<8x128xf32, #tpu.memory_space<vmem>>, vector<8x128xf32>
    %cst_11 = arith.constant dense<0.000000e+00> : vector<2x128xf32>
    %12 = tpu.matmul %10, %11, %cst_11 {dimension_numbers = #tpu.dot_dimension_numbers<[1], [0], [0], [1], [0, 0, 1, 1], [], []>} : vector<2x8xf32>, vector<8x128xf32>, vector<2x128xf32> -> vector<2x128xf32>
    %c0_12 = arith.constant 0 : index
    %c0_13 = arith.constant 0 : index
    %13 = vector.load %arg5[%c0_12, %c0_13] : memref<1x128xf32, #tpu.memory_space<vmem>>, vector<1x128xf32>
    %14 = vector.broadcast %13 : vector<1x128xf32> to vector<2x128xf32>
    %15 = arith.addf %12, %14 : vector<2x128xf32>
    %16 = arith.negf %15 : vector<2x128xf32>
    %17 = math.exp %16 : vector<2x128xf32>
    %cst_14 = arith.constant 1.000000e+00 : f32
    %18 = vector.broadcast %cst_14 : f32 to vector<2x128xf32>
    %19 = arith.addf %18, %17 : vector<2x128xf32>
    %20 = arith.divf %18, %19 : vector<2x128xf32>
    %c0_15 = arith.constant 0 : index
    %c0_16 = arith.constant 0 : index
    %c0_17 = arith.constant 0 : index
    %21 = vector.load %arg1[%c0_15, %c0_16, %c0_17] : memref<2x128x64xf32, #tpu.memory_space<vmem>>, vector<2x128x64xf32>
    %22 = vector.shape_cast %20 : vector<2x128xf32> to vector<2x128x1xf32>
    %23 = vector.broadcast %22 : vector<2x128x1xf32> to vector<2x128x64xf32>
    %24 = arith.mulf %21, %23 : vector<2x128x64xf32>
    %c0_18 = arith.constant 0 : index
    %c0_19 = arith.constant 0 : index
    %c0_20 = arith.constant 0 : index
    %25 = vector.load %arg6[%c0_18, %c0_19, %c0_20] : memref<2x128x64xf32, #tpu.memory_space<vmem>>, vector<2x128x64xf32>
    tpu.vector_store %arg6[%c0_18, %c0_19, %c0_20], %24 {strides = array<i32>} : memref<2x128x64xf32, #tpu.memory_space<vmem>>, vector<2x128x64xf32>,
    return
  }
  func.func @transform_0(%arg0: i32) -> (i32, i32, i32) {
    %c0_i32 = arith.constant 0 : i32
    %c0_i32_0 = arith.constant 0 : i32
    %c0_i32_1 = arith.constant 0 : i32
    return %arg0, %c0_i32, %c0_i32_0 : i32, i32, i32
  }
  func.func @transform_1(%arg0: i32) -> (i32, i32) {
    %c0_i32 = arith.constant 0 : i32
    %c0_i32_0 = arith.constant 0 : i32
    %c0_i32_1 = arith.constant 0 : i32
    return %c0_i32, %c0_i32_0 : i32, i32
  }
  func.func @transform_2(%arg0: i32) -> (i32, i32) {
    %c0_i32 = arith.constant 0 : i32
    %c0_i32_0 = arith.constant 0 : i32
    %c0_i32_1 = arith.constant 0 : i32
    return %c0_i32, %c0_i32_0 : i32, i32
  }
  func.func @transform_3(%arg0: i32) -> (i32, i32) {
    %c0_i32 = arith.constant 0 : i32
    %c0_i32_0 = arith.constant 0 : i32
    %c0_i32_1 = arith.constant 0 : i32
    return %c0_i32, %c0_i32_0 : i32, i32
  }
  func.func @transform_4(%arg0: i32) -> (i32, i32) {
    %c0_i32 = arith.constant 0 : i32
    %c0_i32_0 = arith.constant 0 : i32
    %c0_i32_1 = arith.constant 0 : i32
    return %c0_i32, %c0_i32_0 : i32, i32
  }
  func.func @transform_5(%arg0: i32) -> (i32, i32, i32) {
    %c0_i32 = arith.constant 0 : i32
    %c0_i32_0 = arith.constant 0 : i32
    %c0_i32_1 = arith.constant 0 : i32
    return %arg0, %c0_i32, %c0_i32_0 : i32, i32, i32
  }
}

</mosaic_0001>

<llo_original>
// kernel: tpu_custom_call.1
$region0: #{tpu_custom_call.1}
  #allocation0 [shape = 'u32[]', space=smem, size = 0x4, offset = 0x4, fixed_abs, tag = 'smem constant byte address 0x4 - core index']
  #allocation1 [shape = 'u32[72,128]{1,0:T(1,128)}', space=vmem, size = 0x9000, scoped, tag = 'internal scratch']
  %s0 = inlined_call_operand.vmem [shape: f32[4,128,64], index: 0, kind: input, shape index: {}]
  %s1 = inlined_call_operand.vmem [shape: f32[128,8], index: 1, kind: input, shape index: {}]
  %s2 = inlined_call_operand.vmem [shape: f32[1,8], index: 2, kind: input, shape index: {}]
  %s3 = inlined_call_operand.vmem [shape: f32[8,128], index: 3, kind: input, shape index: {}]
  %s4 = inlined_call_operand.vmem [shape: f32[1,128], index: 4, kind: input, shape index: {}]
  %s5 = inlined_call_operand.vmem [shape: f32[4,128,64], index: 5, kind: output, shape index: {}]
  %s6 = sld [smem:[#allocation0]]
  $region53: #{tpu_custom_call.1} parent=0
    _
  %s8 = ssub.s32 1, %s6
  %s9 = scalar_select 0, %s8, %s6
  loop: start=0, step=1, limit=4
  $region2: #{tpu_custom_call.1} parent=0 // loop_pre_header
    _
  $region3: #{tpu_custom_call.1} parent=0 // loop_header
    %s11 = sphi 0, %s15
    %p12 = scmp.ge.s32.totalorder %s11, 4
    %s21 = sphi 0, %s23
    %s24 = sphi 0, %s21
    %s25 = sphi 0, %s24
    %s41 = sphi 0, %s25
    %s45 = sphi 0, %s45
    %s47 = sphi 0, %s45
    %s48 = sphi 0, %s47
    %s62 = sphi 0, %s48
    %s66 = sphi 0, %s66
    %s68 = sphi 0, %s66
    %s69 = sphi 0, %s68
    %s83 = sphi 0, %s69
    %s87 = sphi 0, %s87
    %s89 = sphi 0, %s87
    %s90 = sphi 0, %s89
    %s104 = sphi 0, %s90
    %s108 = sphi 0, %s108
    %s110 = sphi 0, %s108
    %s111 = sphi 0, %s110
    %s125 = sphi 0, %s111
    %s131 = sphi 0, %s133
    %s134 = sphi 0, %s131
    %s135 = sphi 0, %s134
    %s151 = sphi 0, %s135
  $region4: #{tpu_custom_call.1} parent=0 // loop_header_branch
    %14 = sbr.rel (%p12) target = $region8
  $region5: #{tpu_custom_call.1} parent=0 // loop_body
    %s16 = ssub.s32 %s11, 1
    %s17 = ssub.s32 %s11, 2
    %s18 = sadd.s32 %s11, 1
    %s19 = ssub.s32 %s11, %s18
    %p20 = scmp.eq.s32.totalorder %s19, 0
    %s22 = sadd.s32 %s21, 1
    %s23 = scalar_select %p20, %s21, %s22
    %p26 = pneg %p20
    %p27 = scmp.eq.s32.totalorder %s11, 1
    %p28 = por %p26, %p27
    %p29 = scmp.ne.s32.totalorder %s21, %s24
    %p30 = scmp.eq.s32.totalorder %s11, 0
    %p31 = por %p29, %p30
    %p32 = scmp.ne.s32.totalorder %s21, %s24
    %p33 = scmp.eq.s32.totalorder %s16, 1
    %p34 = por %p32, %p33
    %p35 = scmp.ne.s32.totalorder %s24, %s25
    %p36 = scmp.eq.s32.totalorder %s16, 0
    %p37 = por %p35, %p36
    %p38 = scmp.ne.s32.totalorder %s24, %s25
    %p39 = scmp.eq.s32.totalorder %s17, 1
    %p40 = por %p38, %p39
    %p42 = scmp.ne.s32.totalorder %s25, %s41
    %p43 = scmp.eq.s32.totalorder %s17, 0
    %p44 = por %p42, %p43
    %s46 = sadd.s32 %s45, 1
    %p49 = scmp.eq.s32.totalorder %s11, 1
    %p50 = scmp.ne.s32.totalorder %s45, %s47
    %p51 = scmp.eq.s32.totalorder %s11, 0
    %p52 = por %p50, %p51
    %p53 = scmp.ne.s32.totalorder %s45, %s47
    %p54 = scmp.eq.s32.totalorder %s16, 1
    %p55 = por %p53, %p54
    %p56 = scmp.ne.s32.totalorder %s47, %s48
    %p57 = scmp.eq.s32.totalorder %s16, 0
    %p58 = por %p56, %p57
    %p59 = scmp.ne.s32.totalorder %s47, %s48
    %p60 = scmp.eq.s32.totalorder %s17, 1
    %p61 = por %p59, %p60
    %p63 = scmp.ne.s32.totalorder %s48, %s62
    %p64 = scmp.eq.s32.totalorder %s17, 0
    %p65 = por %p63, %p64
    %s67 = sadd.s32 %s66, 1
    %p70 = scmp.eq.s32.totalorder %s11, 1
    %p71 = scmp.ne.s32.totalorder %s66, %s68
    %p72 = scmp.eq.s32.totalorder %s11, 0
    %p73 = por %p71, %p72
    %p74 = scmp.ne.s32.totalorder %s66, %s68
    %p75 = scmp.eq.s32.totalorder %s16, 1
    %p76 = por %p74, %p75
    %p77 = scmp.ne.s32.totalorder %s68, %s69
    %p78 = scmp.eq.s32.totalorder %s16, 0
    %p79 = por %p77, %p78
    %p80 = scmp.ne.s32.totalorder %s68, %s69
    %p81 = scmp.eq.s32.totalorder %s17, 1
    %p82 = por %p80, %p81
    %p84 = scmp.ne.s32.totalorder %s69, %s83
    %p85 = scmp.eq.s32.totalorder %s17, 0
    %p86 = por %p84, %p85
    %s88 = sadd.s32 %s87, 1
    %p91 = scmp.eq.s32.totalorder %s11, 1
    %p92 = scmp.ne.s32.totalorder %s87, %s89
    %p93 = scmp.eq.s32.totalorder %s11, 0
    %p94 = por %p92, %p93
    %p95 = scmp.ne.s32.totalorder %s87, %s89
    %p96 = scmp.eq.s32.totalorder %s16, 1
    %p97 = por %p95, %p96
    %p98 = scmp.ne.s32.totalorder %s89, %s90
    %p99 = scmp.eq.s32.totalorder %s16, 0
    %p100 = por %p98, %p99
    %p101 = scmp.ne.s32.totalorder %s89, %s90
    %p102 = scmp.eq.s32.totalorder %s17, 1
    %p103 = por %p101, %p102
    %p105 = scmp.ne.s32.totalorder %s90, %s104
    %p106 = scmp.eq.s32.totalorder %s17, 0
    %p107 = por %p105, %p106
    %s109 = sadd.s32 %s108, 1
    %p112 = scmp.eq.s32.totalorder %s11, 1
    %p113 = scmp.ne.s32.totalorder %s108, %s110
    %p114 = scmp.eq.s32.totalorder %s11, 0
    %p115 = por %p113, %p114
    %p116 = scmp.ne.s32.totalorder %s108, %s110
    %p117 = scmp.eq.s32.totalorder %s16, 1
    %p118 = por %p116, %p117
    %p119 = scmp.ne.s32.totalorder %s110, %s111
    %p120 = scmp.eq.s32.totalorder %s16, 0
    %p121 = por %p119, %p120
    %p122 = scmp.ne.s32.totalorder %s110, %s111
    %p123 = scmp.eq.s32.totalorder %s17, 1
    %p124 = por %p122, %p123
    %p126 = scmp.ne.s32.totalorder %s111, %s125
    %p127 = scmp.eq.s32.totalorder %s17, 0
    %p128 = por %p126, %p127
    %s129 = ssub.s32 %s11, %s18
    %p130 = scmp.eq.s32.totalorder %s129, 0
    %s132 = sadd.s32 %s131, 1
    %s133 = scalar_select %p130, %s131, %s132
    %p136 = pneg %p130
    %p137 = scmp.eq.s32.totalorder %s11, 1
    %p138 = por %p136, %p137
    %p139 = scmp.ne.s32.totalorder %s131, %s134
    %p140 = scmp.eq.s32.totalorder %s11, 0
    %p141 = por %p139, %p140
    %p142 = scmp.ne.s32.totalorder %s131, %s134
    %p143 = scmp.eq.s32.totalorder %s16, 1
    %p144 = por %p142, %p143
    %p145 = scmp.ne.s32.totalorder %s134, %s135
    %p146 = scmp.eq.s32.totalorder %s16, 0
    %p147 = por %p145, %p146
    %p148 = scmp.ne.s32.totalorder %s134, %s135
    %p149 = scmp.eq.s32.totalorder %s17, 1
    %p150 = por %p148, %p149
    %p152 = scmp.ne.s32.totalorder %s135, %s151
    %p153 = scmp.eq.s32.totalorder %s17, 0
    %p154 = por %p152, %p153
    %p155 = scmp.le.s32.totalorder 1, %s11
    %p156 = scmp.lt.s32.totalorder %s11, 3
    %p157 = pnand %p155, %p156
    %p158 = pneg %p157
    // Predicated region
    $region9: #{tpu_custom_call.1} parent=5 // pred_check
      _
    $region10: #{tpu_custom_call.1} parent=5 // pred_check_branch
      %160 = sbr.rel (%p157) target = $region12
    $region11: #{tpu_custom_call.1} parent=5 // pred_region
      %s161 = ssub.s32 %s11, 1
      // Predicated region
      $region13: #{tpu_custom_call.1} parent=11 // pred_check
        %p162 = pneg %p58
      $region14: #{tpu_custom_call.1} parent=11 // pred_check_branch
        %164 = sbr.rel (%p162) target = $region16
      $region15: #{tpu_custom_call.1} parent=11 // pred_region
        _
      $region16: #{tpu_custom_call.1} parent=11 // pred_fallthru
        _
      // Predicated region
      $region17: #{tpu_custom_call.1} parent=11 // pred_check
        %p165 = pneg %p79
      $region18: #{tpu_custom_call.1} parent=11 // pred_check_branch
        %167 = sbr.rel (%p165) target = $region20
      $region19: #{tpu_custom_call.1} parent=11 // pred_region
        _
      $region20: #{tpu_custom_call.1} parent=11 // pred_fallthru
        _
      // Predicated region
      $region21: #{tpu_custom_call.1} parent=11 // pred_check
        %p168 = pneg %p100
      $region22: #{tpu_custom_call.1} parent=11 // pred_check_branch
        %170 = sbr.rel (%p168) target = $region24
      $region23: #{tpu_custom_call.1} parent=11 // pred_region
        _
      $region24: #{tpu_custom_call.1} parent=11 // pred_fallthru
        _
      // Predicated region
      $region25: #{tpu_custom_call.1} parent=11 // pred_check
        %p171 = pneg %p121
      $region26: #{tpu_custom_call.1} parent=11 // pred_check_branch
        %173 = sbr.rel (%p171) target = $region28
      $region27: #{tpu_custom_call.1} parent=11 // pred_region
        _
      $region28: #{tpu_custom_call.1} parent=11 // pred_fallthru
        _
    $region12: #{tpu_custom_call.1} parent=5 // pred_fallthru
      _
    %p174 = scmp.lt.s32.totalorder %s11, 2
    // Predicated region
    $region29: #{tpu_custom_call.1} parent=5 // pred_check
      %p175 = pneg %p174
    $region30: #{tpu_custom_call.1} parent=5 // pred_check_branch
      %177 = sbr.rel (%p175) target = $region32
    $region31: #{tpu_custom_call.1} parent=5 // pred_region
      // Predicated region
      $region33: #{tpu_custom_call.1} parent=31 // pred_check
        %p178 = pneg %p31
      $region34: #{tpu_custom_call.1} parent=31 // pred_check_branch
        %180 = sbr.rel (%p178) target = $region36
      $region35: #{tpu_custom_call.1} parent=31 // pred_region
        %s181 = smul.u32 2, %s11
        %p182 = scmp.lt.s32.totalorder %s181, 3
        %s183 = scalar_select %p182, %s181, 3
        %s184 = smul.addr %s183, 16
        %s185 = smul.addr %s184, 8
        %s186 = scalar_lea.vmem %s0, %s185
        %s187 = smul.u32 2, %s11
      $region36: #{tpu_custom_call.1} parent=31 // pred_fallthru
        _
    $region32: #{tpu_custom_call.1} parent=5 // pred_fallthru
      _
    %p188 = scmp.le.s32.totalorder 1, %s11
    %p189 = scmp.lt.s32.totalorder %s11, 3
    %p190 = pnand %p188, %p189
    %p191 = pneg %p190
    // Predicated region
    $region37: #{tpu_custom_call.1} parent=5 // pred_check
      _
    $region38: #{tpu_custom_call.1} parent=5 // pred_check_branch
      %193 = sbr.rel (%p190) target = $region40
    $region39: #{tpu_custom_call.1} parent=5 // pred_region
      %s194 = ssub.s32 %s11, 1
      %s195 = smul.u32 2, %s16
      %p196 = scmp.lt.s32.totalorder %s195, 3
      %s197 = scalar_select %p196, %s195, 3
      %s198 = smul.addr %s197, 16
      %s199 = smul.addr %s198, 8
      %s200 = scalar_lea.vmem %s0, %s199
      %p201 = pneg %p37
      %p202 = pneg %p34
      %p203 = pneg %p58
      %p204 = pneg %p55
      %p205 = pneg %p79
      %p206 = pneg %p76
      %p207 = pneg %p100
      %p208 = pneg %p97
      %p209 = pneg %p121
      %p210 = pneg %p118
      %p211 = pneg %p147
      %p212 = pneg %p144
      %s213 = smul.u32 2, %s16
      %p214 = scmp.lt.s32.totalorder %s213, 3
      %s215 = scalar_select %p214, %s213, 3
      %s216 = smul.addr %s215, 16
      %s217 = smul.addr %s216, 8
      %s218 = scalar_lea.vmem %s5, %s217
      %s219 = smul.u32 2, %s16
      %p220 = scmp.lt.s32.totalorder %s219, 3
      %s221 = scalar_select %p220, %s219, 3
      %s222 = smul.addr %s221, 16
      %s223 = smul.addr %s222, 8
      %s224 = scalar_lea.vmem %s0, %s223
      %s225 = smul.u32 2, %s16
      %s226 = smul.u32 2, %s16
      %p227 = scmp.lt.s32.totalorder %s226, 3
      %s228 = scalar_select %p227, %s226, 3
      %s229 = smul.addr %s228, 16
      %s230 = smul.addr %s229, 8
      %s231 = scalar_lea.vmem %s5, %s230
      %s232 = smul.u32 2, %s16
      %v233 = vld [vmem:[%s224] sm:$0xff]
      %v234 = vld [vmem:[%s224 + $0x8] sm:$0xff]
      %v235 = vld [vmem:[%s224 + $0x10] sm:$0xff]
      %v236 = vld [vmem:[%s224 + $0x18] sm:$0xff]
      %v237 = vld [vmem:[%s224 + $0x20] sm:$0xff]
      %v238 = vld [vmem:[%s224 + $0x28] sm:$0xff]
      %v239 = vld [vmem:[%s224 + $0x30] sm:$0xff]
      %v240 = vld [vmem:[%s224 + $0x38] sm:$0xff]
      %v241 = vld [vmem:[%s224 + $0x40] sm:$0xff]
      %v242 = vld [vmem:[%s224 + $0x48] sm:$0xff]
      %v243 = vld [vmem:[%s224 + $0x50] sm:$0xff]
      %v244 = vld [vmem:[%s224 + $0x58] sm:$0xff]
      %v245 = vld [vmem:[%s224 + $0x60] sm:$0xff]
      %v246 = vld [vmem:[%s224 + $0x68] sm:$0xff]
      %v247 = vld [vmem:[%s224 + $0x70] sm:$0xff]
      %v248 = vld [vmem:[%s224 + $0x78] sm:$0xff]
      %v249 = vld [vmem:[%s224 + $0x80] sm:$0xff]
      %v250 = vld [vmem:[%s224 + $0x88] sm:$0xff]
      %v251 = vld [vmem:[%s224 + $0x90] sm:$0xff]
      %v252 = vld [vmem:[%s224 + $0x98] sm:$0xff]
      %v253 = vld [vmem:[%s224 + $0xa0] sm:$0xff]
      %v254 = vld [vmem:[%s224 + $0xa8] sm:$0xff]
      %v255 = vld [vmem:[%s224 + $0xb0] sm:$0xff]
      %v256 = vld [vmem:[%s224 + $0xb8] sm:$0xff]
      %v257 = vld [vmem:[%s224 + $0xc0] sm:$0xff]
      %v258 = vld [vmem:[%s224 + $0xc8] sm:$0xff]
      %v259 = vld [vmem:[%s224 + $0xd0] sm:$0xff]
      %v260 = vld [vmem:[%s224 + $0xd8] sm:$0xff]
      %v261 = vld [vmem:[%s224 + $0xe0] sm:$0xff]
      %v262 = vld [vmem:[%s224 + $0xe8] sm:$0xff]
      %v263 = vld [vmem:[%s224 + $0xf0] sm:$0xff]
      %v264 = vld [vmem:[%s224 + $0xf8] sm:$0xff]
      %vm265 = vcmask 523264
      %v266 = vsel %vm265, %v233, 0.0
      %267 = vadd.xlane.f32.xlu0 %v266
      %v268 = vpop.xlane.xlu0 %267
      %v269 = vsel %vm265, %v234, 0.0
      %270 = vadd.xlane.f32.xlu0 %v269
      %v271 = vpop.xlane.xlu0 %270
      %v272 = vsel %vm265, %v235, 0.0
      %273 = vadd.xlane.f32.xlu0 %v272
      %v274 = vpop.xlane.xlu0 %273
      %v275 = vsel %vm265, %v236, 0.0
      %276 = vadd.xlane.f32.xlu0 %v275
      %v277 = vpop.xlane.xlu0 %276
      %v278 = vsel %vm265, %v237, 0.0
      %279 = vadd.xlane.f32.xlu0 %v278
      %v280 = vpop.xlane.xlu0 %279
      %v281 = vsel %vm265, %v238, 0.0
      %282 = vadd.xlane.f32.xlu0 %v281
      %v283 = vpop.xlane.xlu0 %282
      %v284 = vsel %vm265, %v239, 0.0
      %285 = vadd.xlane.f32.xlu0 %v284
      %v286 = vpop.xlane.xlu0 %285
      %v287 = vsel %vm265, %v240, 0.0
      %288 = vadd.xlane.f32.xlu0 %v287
      %v289 = vpop.xlane.xlu0 %288
      %v290 = vsel %vm265, %v241, 0.0
      %291 = vadd.xlane.f32.xlu0 %v290
      %v292 = vpop.xlane.xlu0 %291
      %v293 = vsel %vm265, %v242, 0.0
      %294 = vadd.xlane.f32.xlu0 %v293
      %v295 = vpop.xlane.xlu0 %294
      %v296 = vsel %vm265, %v243, 0.0
      %297 = vadd.xlane.f32.xlu0 %v296
      %v298 = vpop.xlane.xlu0 %297
      %v299 = vsel %vm265, %v244, 0.0
      %300 = vadd.xlane.f32.xlu0 %v299
      %v301 = vpop.xlane.xlu0 %300
      %v302 = vsel %vm265, %v245, 0.0
      %303 = vadd.xlane.f32.xlu0 %v302
      %v304 = vpop.xlane.xlu0 %303
      %v305 = vsel %vm265, %v246, 0.0
      %306 = vadd.xlane.f32.xlu0 %v305
      %v307 = vpop.xlane.xlu0 %306
      %v308 = vsel %vm265, %v247, 0.0
      %309 = vadd.xlane.f32.xlu0 %v308
      %v310 = vpop.xlane.xlu0 %309
      %v311 = vsel %vm265, %v248, 0.0
      %312 = vadd.xlane.f32.xlu0 %v311
      %v313 = vpop.xlane.xlu0 %312
      %v314 = vsel %vm265, %v249, 0.0
      %315 = vadd.xlane.f32.xlu0 %v314
      %v316 = vpop.xlane.xlu0 %315
      %v317 = vsel %vm265, %v250, 0.0
      %318 = vadd.xlane.f32.xlu0 %v317
      %v319 = vpop.xlane.xlu0 %318
      %v320 = vsel %vm265, %v251, 0.0
      %321 = vadd.xlane.f32.xlu0 %v320
      %v322 = vpop.xlane.xlu0 %321
      %v323 = vsel %vm265, %v252, 0.0
      %324 = vadd.xlane.f32.xlu0 %v323
      %v325 = vpop.xlane.xlu0 %324
      %v326 = vsel %vm265, %v253, 0.0
      %327 = vadd.xlane.f32.xlu0 %v326
      %v328 = vpop.xlane.xlu0 %327
      %v329 = vsel %vm265, %v254, 0.0
      %330 = vadd.xlane.f32.xlu0 %v329
      %v331 = vpop.xlane.xlu0 %330
      %v332 = vsel %vm265, %v255, 0.0
      %333 = vadd.xlane.f32.xlu0 %v332
      %v334 = vpop.xlane.xlu0 %333
      %v335 = vsel %vm265, %v256, 0.0
      %336 = vadd.xlane.f32.xlu0 %v335
      %v337 = vpop.xlane.xlu0 %336
      %v338 = vsel %vm265, %v257, 0.0
      %339 = vadd.xlane.f32.xlu0 %v338
      %v340 = vpop.xlane.xlu0 %339
      %v341 = vsel %vm265, %v258, 0.0
      %342 = vadd.xlane.f32.xlu0 %v341
      %v343 = vpop.xlane.xlu0 %342
      %v344 = vsel %vm265, %v259, 0.0
      %345 = vadd.xlane.f32.xlu0 %v344
      %v346 = vpop.xlane.xlu0 %345
      %v347 = vsel %vm265, %v260, 0.0
      %348 = vadd.xlane.f32.xlu0 %v347
      %v349 = vpop.xlane.xlu0 %348
      %v350 = vsel %vm265, %v261, 0.0
      %351 = vadd.xlane.f32.xlu0 %v350
      %v352 = vpop.xlane.xlu0 %351
      %v353 = vsel %vm265, %v262, 0.0
      %354 = vadd.xlane.f32.xlu0 %v353
      %v355 = vpop.xlane.xlu0 %354
      %v356 = vsel %vm265, %v263, 0.0
      %357 = vadd.xlane.f32.xlu0 %v356
      %v358 = vpop.xlane.xlu0 %357
      %v359 = vsel %vm265, %v264, 0.0
      %360 = vadd.xlane.f32.xlu0 %v359
      %v361 = vpop.xlane.xlu0 %360
      %v362 = vmul.f32 %v268, 0.015625
      %v363 = vmul.f32 %v271, 0.015625
      %v364 = vmul.f32 %v274, 0.015625
      %v365 = vmul.f32 %v277, 0.015625
      %v366 = vmul.f32 %v280, 0.015625
      %v367 = vmul.f32 %v283, 0.015625
      %v368 = vmul.f32 %v286, 0.015625
      %v369 = vmul.f32 %v289, 0.015625
      %v370 = vmul.f32 %v292, 0.015625
      %v371 = vmul.f32 %v295, 0.015625
      %v372 = vmul.f32 %v298, 0.015625
      %v373 = vmul.f32 %v301, 0.015625
      %v374 = vmul.f32 %v304, 0.015625
      %v375 = vmul.f32 %v307, 0.015625
      %v376 = vmul.f32 %v310, 0.015625
      %v377 = vmul.f32 %v313, 0.015625
      %v378 = vmul.f32 %v316, 0.015625
      %v379 = vmul.f32 %v319, 0.015625
      %v380 = vmul.f32 %v322, 0.015625
      %v381 = vmul.f32 %v325, 0.015625
      %v382 = vmul.f32 %v328, 0.015625
      %v383 = vmul.f32 %v331, 0.015625
      %v384 = vmul.f32 %v334, 0.015625
      %v385 = vmul.f32 %v337, 0.015625
      %v386 = vmul.f32 %v340, 0.015625
      %v387 = vmul.f32 %v343, 0.015625
      %v388 = vmul.f32 %v346, 0.015625
      %v389 = vmul.f32 %v349, 0.015625
      %v390 = vmul.f32 %v352, 0.015625
      %v391 = vmul.f32 %v355, 0.015625
      %v392 = vmul.f32 %v358, 0.015625
      %v393 = vmul.f32 %v361, 0.015625
      %v394 = vld [vmem:[%s1] sm:$0xff]
      %v395 = vld [vmem:[%s1 + $0x8] sm:$0xff]
      %v396 = vld [vmem:[%s1 + $0x10] sm:$0xff]
      %v397 = vld [vmem:[%s1 + $0x18] sm:$0xff]
      %v398 = vld [vmem:[%s1 + $0x20] sm:$0xff]
      %v399 = vld [vmem:[%s1 + $0x28] sm:$0xff]
      %v400 = vld [vmem:[%s1 + $0x30] sm:$0xff]
      %v401 = vld [vmem:[%s1 + $0x38] sm:$0xff]
      %v402 = vld [vmem:[%s1 + $0x40] sm:$0xff]
      %v403 = vld [vmem:[%s1 + $0x48] sm:$0xff]
      %v404 = vld [vmem:[%s1 + $0x50] sm:$0xff]
      %v405 = vld [vmem:[%s1 + $0x58] sm:$0xff]
      %v406 = vld [vmem:[%s1 + $0x60] sm:$0xff]
      %v407 = vld [vmem:[%s1 + $0x68] sm:$0xff]
      %v408 = vld [vmem:[%s1 + $0x70] sm:$0xff]
      %v409 = vld [vmem:[%s1 + $0x78] sm:$0xff]
      %v410 = vld [vmem:[%s2] sm:$0x1]
      %v412 = vperm.slane %v410, 0
      %v446 = vlaneseq
      %v447 = vand.u32 %v446, 127
      %v448 = vperm.slane %v362, %v447
      %v449 = vadd.s32 %v447, 4294967288
      %v450 = vperm.slane %v363, %v449
      %vm451 = vcmask 130112
      %v452 = vsel %vm451, %v450, %v448
      %v453 = vadd.s32 %v447, 4294967280
      %v454 = vperm.slane %v364, %v453
      %vm455 = vcmask 195712
      %v456 = vsel %vm455, %v454, %v452
      %v457 = vadd.s32 %v447, 4294967272
      %v458 = vperm.slane %v365, %v457
      %vm459 = vcmask 261312
      %v460 = vsel %vm459, %v458, %v456
      %v461 = vadd.s32 %v447, 4294967264
      %v462 = vperm.slane %v366, %v461
      %vm463 = vcmask 326912
      %v464 = vsel %vm463, %v462, %v460
      %v465 = vadd.s32 %v447, 4294967256
      %v466 = vperm.slane %v367, %v465
      %vm467 = vcmask 392512
      %v468 = vsel %vm467, %v466, %v464
      %v469 = vadd.s32 %v447, 4294967248
      %v470 = vperm.slane %v368, %v469
      %vm471 = vcmask 458112
      %v472 = vsel %vm471, %v470, %v468
      %v473 = vadd.s32 %v447, 4294967240
      %v474 = vperm.slane %v369, %v473
      %vm475 = vcmask 523712
      %v476 = vsel %vm475, %v474, %v472
      %v477 = vadd.s32 %v447, 4294967232
      %v478 = vperm.slane %v370, %v477
      %vm479 = vcmask 589312
      %v480 = vsel %vm479, %v478, %v476
      %v481 = vadd.s32 %v447, 4294967224
      %v482 = vperm.slane %v371, %v481
      %vm483 = vcmask 654912
      %v484 = vsel %vm483, %v482, %v480
      %v485 = vadd.s32 %v447, 4294967216
      %v486 = vperm.slane %v372, %v485
      %vm487 = vcmask 720512
      %v488 = vsel %vm487, %v486, %v484
      %v489 = vadd.s32 %v447, 4294967208
      %v490 = vperm.slane %v373, %v489
      %vm491 = vcmask 786112
      %v492 = vsel %vm491, %v490, %v488
      %v493 = vadd.s32 %v447, 4294967200
      %v494 = vperm.slane %v374, %v493
      %vm495 = vcmask 851712
      %v496 = vsel %vm495, %v494, %v492
      %v497 = vadd.s32 %v447, 4294967192
      %v498 = vperm.slane %v375, %v497
      %vm499 = vcmask 917312
      %v500 = vsel %vm499, %v498, %v496
      %v501 = vadd.s32 %v447, 4294967184
      %v502 = vperm.slane %v376, %v501
      %vm503 = vcmask 982912
      %v504 = vsel %vm503, %v502, %v500
      %v505 = vadd.s32 %v447, 4294967176
      %v506 = vperm.slane %v377, %v505
      %vm507 = vcmask 1048512
      %v508 = vsel %vm507, %v506, %v504
      %v509 = vperm.slane %v378, %v447
      %v510 = vperm.slane %v379, %v449
      %v511 = vsel %vm451, %v510, %v509
      %v512 = vperm.slane %v380, %v453
      %v513 = vsel %vm455, %v512, %v511
      %v514 = vperm.slane %v381, %v457
      %v515 = vsel %vm459, %v514, %v513
      %v516 = vperm.slane %v382, %v461
      %v517 = vsel %vm463, %v516, %v515
      %v518 = vperm.slane %v383, %v465
      %v519 = vsel %vm467, %v518, %v517
      %v520 = vperm.slane %v384, %v469
      %v521 = vsel %vm471, %v520, %v519
      %v522 = vperm.slane %v385, %v473
      %v523 = vsel %vm475, %v522, %v521
      %v524 = vperm.slane %v386, %v477
      %v525 = vsel %vm479, %v524, %v523
      %v526 = vperm.slane %v387, %v481
      %v527 = vsel %vm483, %v526, %v525
      %v528 = vperm.slane %v388, %v485
      %v529 = vsel %vm487, %v528, %v527
      %v530 = vperm.slane %v389, %v489
      %v531 = vsel %vm491, %v530, %v529
      %v532 = vperm.slane %v390, %v493
      %v533 = vsel %vm495, %v532, %v531
      %v534 = vperm.slane %v391, %v497
      %v535 = vsel %vm499, %v534, %v533
      %v536 = vperm.slane %v392, %v501
      %v537 = vsel %vm503, %v536, %v535
      %v538 = vperm.slane %v393, %v505
      %v539 = vsel %vm507, %v538, %v537
      %vm540 = vcmask 1041409
      %v541 = vsel %vm540, %v539, %v508
      %543 = vmatpush.msra.mxu0 %v409
      %544 = vmatpush.msra.mxu0 %v408
      %545 = vmatpush.msra.mxu0 %v407
      %546 = vmatpush.msra.mxu0 %v406
      %547 = vmatpush.msra.mxu0 %v405
      %548 = vmatpush.msra.mxu0 %v404
      %549 = vmatpush.msra.mxu0 %v403
      %550 = vmatpush.msra.mxu0 %v402
      %551 = vmatpush.msra.mxu0 %v401
      %552 = vmatpush.msra.mxu0 %v400
      %553 = vmatpush.msra.mxu0 %v399
      %554 = vmatpush.msra.mxu0 %v398
      %555 = vmatpush.msra.mxu0 %v397
      %556 = vmatpush.msra.mxu0 %v396
      %557 = vmatpush.msra.mxu0 %v395
      %558 = vmatpush.msra.mxu0 %v394
      %559 = vmatmul.f32.gmra.mxu0 %v541
      %v560 = vpop.f32.mrf.mxu0
      %v561 = vadd.f32 %v412, %v560
      %562 = vdwg.mxu0
      %v563 = vmax.f32 %v561, 0.0
      %v564 = vld [vmem:[%s3] sm:$0xff]
      %v565 = vld [vmem:[%s4] sm:$0x1]
      %v567 = vperm.slane %v565, 0
      %vm569 = vcmask 64512
      %v571 = vsel %vm569, %v563, 0
      %573 = vmatpush.msra.mxu0 0.0
      %574 = vmatpush.msra.mxu0 0.0
      %575 = vmatpush.msra.mxu0 0.0
      %576 = vmatpush.msra.mxu0 0.0
      %577 = vmatpush.msra.mxu0 0.0
      %578 = vmatpush.msra.mxu0 0.0
      %579 = vmatpush.msra.mxu0 0.0
      %580 = vmatpush.msra.mxu0 0.0
      %581 = vmatpush.msra.mxu0 0.0
      %582 = vmatpush.msra.mxu0 0.0
      %583 = vmatpush.msra.mxu0 0.0
      %584 = vmatpush.msra.mxu0 0.0
      %585 = vmatpush.msra.mxu0 0.0
      %586 = vmatpush.msra.mxu0 0.0
      %587 = vmatpush.msra.mxu0 0.0
      %588 = vmatpush.msra.mxu0 %v564
      %589 = vmatmul.f32.gmra.mxu0 %v571
      %v590 = vpop.f32.mrf.mxu0
      %v591 = vadd.f32 %v567, %v590
      %592 = vdwg.mxu0
      %v593 = vxor.u32 %v591, 2147483648
      %v594 = vmul.f32 %v593, 1.442695
      %v595 = vpow.pop %v594
      %v596 = vadd.f32 %v595, 1.0
      %v597 = vrcp.pop %v596
      %v598 = vmul.f32 %v596, %v597
      %v599 = vsub.f32 1.0, %v598
      %v600 = vmul.f32 %v597, %v599
      %v601 = vadd.f32 %v597, %v600
      %vm602 = vweird.f32 %v596
      %vm603 = vweird.f32 %v597
      %vm604 = vmor %vm602, %vm603
      %v605 = vsel %vm604, %v597, %v601
      %v606 = vand.u32 2147483647, %v596
      %vm607 = vcmp.eq.f32.partialorder %v606, 8.507059e+37
      %v608 = vand.u32 %v596, 2147483648
      %v609 = vor.u32 1.1754944e-38, %v608
      %v610 = vsel %vm607, %v609, %v605
      %v611 = vmul.f32 1.0, %v610
      %v612 = vperm.slane %v611, 0
      %v613 = vlaneseq
      %v614 = vshrl.u32 %v613, 7
      %616 = vset.pattern.permute.xlu0 %v614
      %617 = vperm.xlu0 %616, %v612
      %v618 = vpop.permute.xlu0 %617
      %v619 = vlaneseq
      %v620 = vshrl.u32 %v619, 7
      %v621 = vadd.s32 %v620, 8
      %622 = vset.pattern.permute.xlu0 %v621
      %623 = vperm.xlu0 %622, %v612
      %v624 = vpop.permute.xlu0 %623
      %v625 = vlaneseq
      %v626 = vshrl.u32 %v625, 7
      %v627 = vadd.s32 %v626, 16
      %628 = vset.pattern.permute.xlu0 %v627
      %629 = vperm.xlu0 %628, %v612
      %v630 = vpop.permute.xlu0 %629
      %v631 = vlaneseq
      %v632 = vshrl.u32 %v631, 7
      %v633 = vadd.s32 %v632, 24
      %634 = vset.pattern.permute.xlu0 %v633
      %635 = vperm.xlu0 %634, %v612
      %v636 = vpop.permute.xlu0 %635
      %v637 = vlaneseq
      %v638 = vshrl.u32 %v637, 7
      %v639 = vadd.s32 %v638, 32
      %640 = vset.pattern.permute.xlu0 %v639
      %641 = vperm.xlu0 %640, %v612
      %v642 = vpop.permute.xlu0 %641
      %v643 = vlaneseq
      %v644 = vshrl.u32 %v643, 7
      %v645 = vadd.s32 %v644, 40
      %646 = vset.pattern.permute.xlu0 %v645
      %647 = vperm.xlu0 %646, %v612
      %v648 = vpop.permute.xlu0 %647
      %v649 = vlaneseq
      %v650 = vshrl.u32 %v649, 7
      %v651 = vadd.s32 %v650, 48
      %652 = vset.pattern.permute.xlu0 %v651
      %653 = vperm.xlu0 %652, %v612
      %v654 = vpop.permute.xlu0 %653
      %v655 = vlaneseq
      %v656 = vshrl.u32 %v655, 7
      %v657 = vadd.s32 %v656, 56
      %658 = vset.pattern.permute.xlu0 %v657
      %659 = vperm.xlu0 %658, %v612
      %v660 = vpop.permute.xlu0 %659
      %v661 = vlaneseq
      %v662 = vshrl.u32 %v661, 7
      %v663 = vadd.s32 %v662, 64
      %664 = vset.pattern.permute.xlu0 %v663
      %665 = vperm.xlu0 %664, %v612
      %v666 = vpop.permute.xlu0 %665
      %v667 = vlaneseq
      %v668 = vshrl.u32 %v667, 7
      %v669 = vadd.s32 %v668, 72
      %670 = vset.pattern.permute.xlu0 %v669
      %671 = vperm.xlu0 %670, %v612
      %v672 = vpop.permute.xlu0 %671
      %v673 = vlaneseq
      %v674 = vshrl.u32 %v673, 7
      %v675 = vadd.s32 %v674, 80
      %676 = vset.pattern.permute.xlu0 %v675
      %677 = vperm.xlu0 %676, %v612
      %v678 = vpop.permute.xlu0 %677
      %v679 = vlaneseq
      %v680 = vshrl.u32 %v679, 7
      %v681 = vadd.s32 %v680, 88
      %682 = vset.pattern.permute.xlu0 %v681
      %683 = vperm.xlu0 %682, %v612
      %v684 = vpop.permute.xlu0 %683
      %v685 = vlaneseq
      %v686 = vshrl.u32 %v685, 7
      %v687 = vadd.s32 %v686, 96
      %688 = vset.pattern.permute.xlu0 %v687
      %689 = vperm.xlu0 %688, %v612
      %v690 = vpop.permute.xlu0 %689
      %v691 = vlaneseq
      %v692 = vshrl.u32 %v691, 7
      %v693 = vadd.s32 %v692, 104
      %694 = vset.pattern.permute.xlu0 %v693
      %695 = vperm.xlu0 %694, %v612
      %v696 = vpop.permute.xlu0 %695
      %v697 = vlaneseq
      %v698 = vshrl.u32 %v697, 7
      %v699 = vadd.s32 %v698, 112
      %700 = vset.pattern.permute.xlu0 %v699
      %701 = vperm.xlu0 %700, %v612
      %v702 = vpop.permute.xlu0 %701
      %v703 = vlaneseq
      %v704 = vshrl.u32 %v703, 7
      %v705 = vadd.s32 %v704, 120
      %706 = vset.pattern.permute.xlu0 %v705
      %707 = vperm.xlu0 %706, %v612
      %v708 = vpop.permute.xlu0 %707
      %v709 = vperm.slane %v611, 1
      %v710 = vlaneseq
      %v711 = vshrl.u32 %v710, 7
      %713 = vset.pattern.permute.xlu0 %v711
      %714 = vperm.xlu0 %713, %v709
      %v715 = vpop.permute.xlu0 %714
      %v716 = vlaneseq
      %v717 = vshrl.u32 %v716, 7
      %v718 = vadd.s32 %v717, 8
      %719 = vset.pattern.permute.xlu0 %v718
      %720 = vperm.xlu0 %719, %v709
      %v721 = vpop.permute.xlu0 %720
      %v722 = vlaneseq
      %v723 = vshrl.u32 %v722, 7
      %v724 = vadd.s32 %v723, 16
      %725 = vset.pattern.permute.xlu0 %v724
      %726 = vperm.xlu0 %725, %v709
      %v727 = vpop.permute.xlu0 %726
      %v728 = vlaneseq
      %v729 = vshrl.u32 %v728, 7
      %v730 = vadd.s32 %v729, 24
      %731 = vset.pattern.permute.xlu0 %v730
      %732 = vperm.xlu0 %731, %v709
      %v733 = vpop.permute.xlu0 %732
      %v734 = vlaneseq
      %v735 = vshrl.u32 %v734, 7
      %v736 = vadd.s32 %v735, 32
      %737 = vset.pattern.permute.xlu0 %v736
      %738 = vperm.xlu0 %737, %v709
      %v739 = vpop.permute.xlu0 %738
      %v740 = vlaneseq
      %v741 = vshrl.u32 %v740, 7
      %v742 = vadd.s32 %v741, 40
      %743 = vset.pattern.permute.xlu0 %v742
      %744 = vperm.xlu0 %743, %v709
      %v745 = vpop.permute.xlu0 %744
      %v746 = vlaneseq
      %v747 = vshrl.u32 %v746, 7
      %v748 = vadd.s32 %v747, 48
      %749 = vset.pattern.permute.xlu0 %v748
      %750 = vperm.xlu0 %749, %v709
      %v751 = vpop.permute.xlu0 %750
      %v752 = vlaneseq
      %v753 = vshrl.u32 %v752, 7
      %v754 = vadd.s32 %v753, 56
      %755 = vset.pattern.permute.xlu0 %v754
      %756 = vperm.xlu0 %755, %v709
      %v757 = vpop.permute.xlu0 %756
      %v758 = vlaneseq
      %v759 = vshrl.u32 %v758, 7
      %v760 = vadd.s32 %v759, 64
      %761 = vset.pattern.permute.xlu0 %v760
      %762 = vperm.xlu0 %761, %v709
      %v763 = vpop.permute.xlu0 %762
      %v764 = vlaneseq
      %v765 = vshrl.u32 %v764, 7
      %v766 = vadd.s32 %v765, 72
      %767 = vset.pattern.permute.xlu0 %v766
      %768 = vperm.xlu0 %767, %v709
      %v769 = vpop.permute.xlu0 %768
      %v770 = vlaneseq
      %v771 = vshrl.u32 %v770, 7
      %v772 = vadd.s32 %v771, 80
      %773 = vset.pattern.permute.xlu0 %v772
      %774 = vperm.xlu0 %773, %v709
      %v775 = vpop.permute.xlu0 %774
      %v776 = vlaneseq
      %v777 = vshrl.u32 %v776, 7
      %v778 = vadd.s32 %v777, 88
      %779 = vset.pattern.permute.xlu0 %v778
      %780 = vperm.xlu0 %779, %v709
      %v781 = vpop.permute.xlu0 %780
      %v782 = vlaneseq
      %v783 = vshrl.u32 %v782, 7
      %v784 = vadd.s32 %v783, 96
      %785 = vset.pattern.permute.xlu0 %v784
      %786 = vperm.xlu0 %785, %v709
      %v787 = vpop.permute.xlu0 %786
      %v788 = vlaneseq
      %v789 = vshrl.u32 %v788, 7
      %v790 = vadd.s32 %v789, 104
      %791 = vset.pattern.permute.xlu0 %v790
      %792 = vperm.xlu0 %791, %v709
      %v793 = vpop.permute.xlu0 %792
      %v794 = vlaneseq
      %v795 = vshrl.u32 %v794, 7
      %v796 = vadd.s32 %v795, 112
      %797 = vset.pattern.permute.xlu0 %v796
      %798 = vperm.xlu0 %797, %v709
      %v799 = vpop.permute.xlu0 %798
      %v800 = vlaneseq
      %v801 = vshrl.u32 %v800, 7
      %v802 = vadd.s32 %v801, 120
      %803 = vset.pattern.permute.xlu0 %v802
      %804 = vperm.xlu0 %803, %v709
      %v805 = vpop.permute.xlu0 %804
      %v806 = vmul.f32 %v233, %v618
      %v807 = vmul.f32 %v234, %v624
      %v808 = vmul.f32 %v235, %v630
      %v809 = vmul.f32 %v236, %v636
      %v810 = vmul.f32 %v237, %v642
      %v811 = vmul.f32 %v238, %v648
      %v812 = vmul.f32 %v239, %v654
      %v813 = vmul.f32 %v240, %v660
      %v814 = vmul.f32 %v241, %v666
      %v815 = vmul.f32 %v242, %v672
      %v816 = vmul.f32 %v243, %v678
      %v817 = vmul.f32 %v244, %v684
      %v818 = vmul.f32 %v245, %v690
      %v819 = vmul.f32 %v246, %v696
      %v820 = vmul.f32 %v247, %v702
      %v821 = vmul.f32 %v248, %v708
      %v822 = vmul.f32 %v249, %v715
      %v823 = vmul.f32 %v250, %v721
      %v824 = vmul.f32 %v251, %v727
      %v825 = vmul.f32 %v252, %v733
      %v826 = vmul.f32 %v253, %v739
      %v827 = vmul.f32 %v254, %v745
      %v828 = vmul.f32 %v255, %v751
      %v829 = vmul.f32 %v256, %v757
      %v830 = vmul.f32 %v257, %v763
      %v831 = vmul.f32 %v258, %v769
      %v832 = vmul.f32 %v259, %v775
      %v833 = vmul.f32 %v260, %v781
      %v834 = vmul.f32 %v261, %v787
      %v835 = vmul.f32 %v262, %v793
      %v836 = vmul.f32 %v263, %v799
      %v837 = vmul.f32 %v264, %v805
      %838 = vst.msk [vmem:[%s231] sm:$0xff] %vm265, %v806
      %839 = vst.msk [vmem:[%s231 + $0x8] sm:$0xff] %vm265, %v807
      %840 = vst.msk [vmem:[%s231 + $0x10] sm:$0xff] %vm265, %v808
      %841 = vst.msk [vmem:[%s231 + $0x18] sm:$0xff] %vm265, %v809
      %842 = vst.msk [vmem:[%s231 + $0x20] sm:$0xff] %vm265, %v810
      %843 = vst.msk [vmem:[%s231 + $0x28] sm:$0xff] %vm265, %v811
      %844 = vst.msk [vmem:[%s231 + $0x30] sm:$0xff] %vm265, %v812
      %845 = vst.msk [vmem:[%s231 + $0x38] sm:$0xff] %vm265, %v813
      %846 = vst.msk [vmem:[%s231 + $0x40] sm:$0xff] %vm265, %v814
      %847 = vst.msk [vmem:[%s231 + $0x48] sm:$0xff] %vm265, %v815
      %848 = vst.msk [vmem:[%s231 + $0x50] sm:$0xff] %vm265, %v816
      %849 = vst.msk [vmem:[%s231 + $0x58] sm:$0xff] %vm265, %v817
      %850 = vst.msk [vmem:[%s231 + $0x60] sm:$0xff] %vm265, %v818
      %851 = vst.msk [vmem:[%s231 + $0x68] sm:$0xff] %vm265, %v819
      %852 = vst.msk [vmem:[%s231 + $0x70] sm:$0xff] %vm265, %v820
      %853 = vst.msk [vmem:[%s231 + $0x78] sm:$0xff] %vm265, %v821
      %854 = vst.msk [vmem:[%s231 + $0x80] sm:$0xff] %vm265, %v822
      %855 = vst.msk [vmem:[%s231 + $0x88] sm:$0xff] %vm265, %v823
      %856 = vst.msk [vmem:[%s231 + $0x90] sm:$0xff] %vm265, %v824
      %857 = vst.msk [vmem:[%s231 + $0x98] sm:$0xff] %vm265, %v825
      %858 = vst.msk [vmem:[%s231 + $0xa0] sm:$0xff] %vm265, %v826
      %859 = vst.msk [vmem:[%s231 + $0xa8] sm:$0xff] %vm265, %v827
      %860 = vst.msk [vmem:[%s231 + $0xb0] sm:$0xff] %vm265, %v828
      %861 = vst.msk [vmem:[%s231 + $0xb8] sm:$0xff] %vm265, %v829
      %862 = vst.msk [vmem:[%s231 + $0xc0] sm:$0xff] %vm265, %v830
      %863 = vst.msk [vmem:[%s231 + $0xc8] sm:$0xff] %vm265, %v831
      %864 = vst.msk [vmem:[%s231 + $0xd0] sm:$0xff] %vm265, %v832
      %865 = vst.msk [vmem:[%s231 + $0xd8] sm:$0xff] %vm265, %v833
      %866 = vst.msk [vmem:[%s231 + $0xe0] sm:$0xff] %vm265, %v834
      %867 = vst.msk [vmem:[%s231 + $0xe8] sm:$0xff] %vm265, %v835
      %868 = vst.msk [vmem:[%s231 + $0xf0] sm:$0xff] %vm265, %v836
      %869 = vst.msk [vmem:[%s231 + $0xf8] sm:$0xff] %vm265, %v837
      %s870 = smul.u32 2, %s16
      %p871 = scmp.lt.s32.totalorder %s870, 3
      %s872 = scalar_select %p871, %s870, 3
      %s873 = smul.addr %s872, 16
      %s874 = smul.addr %s873, 8
      %s875 = scalar_lea.vmem %s5, %s874
      // Predicated region
      $region41: #{tpu_custom_call.1} parent=39 // pred_check
        %p876 = pneg %p144
      $region42: #{tpu_custom_call.1} parent=39 // pred_check_branch
        %878 = sbr.rel (%p876) target = $region44
      $region43: #{tpu_custom_call.1} parent=39 // pred_region
        %s879 = smul.u32 2, %s16
      $region44: #{tpu_custom_call.1} parent=39 // pred_fallthru
        _
    $region40: #{tpu_custom_call.1} parent=5 // pred_fallthru
      _
    %p880 = scmp.le.s32.totalorder 2, %s11
    // Predicated region
    $region45: #{tpu_custom_call.1} parent=5 // pred_check
      %p881 = pneg %p880
    $region46: #{tpu_custom_call.1} parent=5 // pred_check_branch
      %883 = sbr.rel (%p881) target = $region48
    $region47: #{tpu_custom_call.1} parent=5 // pred_region
      %s884 = ssub.s32 %s11, 2
      // Predicated region
      $region49: #{tpu_custom_call.1} parent=47 // pred_check
        %p885 = pneg %p150
      $region50: #{tpu_custom_call.1} parent=47 // pred_check_branch
        %887 = sbr.rel (%p885) target = $region52
      $region51: #{tpu_custom_call.1} parent=47 // pred_region
        %s888 = smul.u32 2, %s17
        %p889 = scmp.lt.s32.totalorder %s888, 3
        %s890 = scalar_select %p889, %s888, 3
        %s891 = smul.addr %s890, 16
        %s892 = smul.addr %s891, 8
        %s893 = scalar_lea.vmem %s5, %s892
      $region52: #{tpu_custom_call.1} parent=47 // pred_fallthru
        _
    $region48: #{tpu_custom_call.1} parent=5 // pred_fallthru
      _
  $region6: #{tpu_custom_call.1} parent=0 // loop_footer
    %s15 = sadd.s32 1, %s11
  $region7: #{tpu_custom_call.1} parent=0 // loop_footer_branch
    %10 = sbr.rel target = $region3
  $region8: #{tpu_custom_call.1} parent=0 // loop_exit
    _

</llo_original>
